<compile_context>
chip_gen: v7x
topology: tpu7x:2x2x1
jax: 0.10.0
libtpu: 0.0.40
codegen_flags: <defaults>
</compile_context>

<pallas_src>
import functools

import jax
import jax.numpy as jnp
from jax.experimental import pallas as pl
from jax.experimental.pallas import tpu as pltpu

_LANES = 128
_ACC_ROWS = 8          # one f32 vreg worth of sublanes per accumulator
_NUM_CORE_SLICES = 2   # leading "parallel" grid axis (v7x has 2 TCs/chip)


def _ewc_kernel(p_ref, init_ref, fisher_ref, out_ref, *, chunk_rows):
    """Accumulate sum(fisher * (p - p0)^2) for one (TR, 128) tile.

    p_ref / init_ref / fisher_ref: (TR, 128) tiles in their native dtype.
    out_ref: (8, 128) f32 accumulator, VMEM-resident across the reduction axis.
    """
    @pl.when(pl.program_id(1) == 0)
    def _():
        out_ref[...] = jnp.zeros_like(out_ref)

    tr = p_ref.shape[0]
    n_chunks = tr // chunk_rows

    def body(c, carry):
        r0 = pl.multiple_of(c * chunk_rows, chunk_rows)
        p = p_ref[pl.ds(r0, chunk_rows), :].astype(jnp.float32)
        q = init_ref[pl.ds(r0, chunk_rows), :].astype(jnp.float32)
        f = fisher_ref[pl.ds(r0, chunk_rows), :].astype(jnp.float32)
        d = p - q
        v = f * d * d
        # Fold the chunk into one vreg-shaped (8, 128) partial: pure VPU adds,
        # no cross-sublane XLU reduce on the loop-carried accumulator path.
        out_ref[...] += v.reshape(chunk_rows // _ACC_ROWS, _ACC_ROWS, _LANES).sum(axis=0)
        return carry

    jax.lax.fori_loop(0, n_chunks, body, 0)


def _pad_to(x, total):
    pad = total - x.shape[0]
    if pad:
        x = jnp.concatenate([x, jnp.zeros((pad,), dtype=x.dtype)])
    return x


def _sublane_multiple(dtype):
    # Native tiling: f32 -> 8 sublanes, bf16 -> 16, int8/fp8 -> 32.
    return max(8, 8 * (4 // max(1, jnp.dtype(dtype).itemsize)))


def make_loss_params_regular(params_init, params_fisher, *, gamma=50000.0,
                             tile_rows=8192, trainable=None):
    """Factory: caches padded init/fisher layouts, returns loss_fn(params)."""
    names = [n for n in sorted(params_init)
             if trainable is None or trainable.get(n, True)]
    if not names:
        return lambda params: jnp.float32(0.0)

    p0 = jnp.concatenate([jnp.ravel(params_init[n]) for n in names])
    f = jnp.concatenate([jnp.ravel(params_fisher[n]) for n in names])
    n_elems = int(p0.shape[0])
    rows = pl.cdiv(n_elems, _LANES)

    # Dtype-aware sublane floor (live params assumed to share init's dtype).
    sub = max(_sublane_multiple(p0.dtype), _sublane_multiple(f.dtype))

    tr = max(sub, (int(tile_rows) // sub) * sub)
    rows_half = pl.cdiv(rows, _NUM_CORE_SLICES)          # work per core slice
    tr = min(tr, max(sub, pl.cdiv(rows_half, sub) * sub))  # don't exceed data

    rows_pad = pl.cdiv(rows, _NUM_CORE_SLICES * tr) * _NUM_CORE_SLICES * tr
    nb_per_core = rows_pad // (_NUM_CORE_SLICES * tr)
    total = rows_pad * _LANES

    # Bounded in-kernel chunk (must divide tr, multiple of `sub`).
    chunk = min(1024, tr)
    while tr % chunk:
        chunk -= sub

    # Constant streams: padded + reshaped ONCE and cached in this closure.
    p0_2d = _pad_to(p0, total).reshape(rows_pad, _LANES)
    f_2d = _pad_to(f, total).reshape(rows_pad, _LANES)    # fisher pad = 0

    in_spec = pl.BlockSpec((tr, _LANES),
                           lambda p, i: (p * nb_per_core + i, 0))
    call = pl.pallas_call(
        functools.partial(_ewc_kernel, chunk_rows=chunk),
        out_shape=jax.ShapeDtypeStruct((_NUM_CORE_SLICES * _ACC_ROWS, _LANES),
                                       jnp.float32),
        grid=(_NUM_CORE_SLICES, nb_per_core),
        in_specs=[in_spec, in_spec, in_spec],
        out_specs=pl.BlockSpec((_ACC_ROWS, _LANES), lambda p, i: (p, 0)),
        compiler_params=pltpu.CompilerParams(
            dimension_semantics=("parallel", "arbitrary"),
            vmem_limit_bytes=32 * 1024 * 1024,
        ),
    )

    scale = 0.5 * float(gamma)

    def loss_fn(params):
        p = jnp.concatenate([jnp.ravel(params[n]) for n in names])
        p2 = _pad_to(p, total).reshape(rows_pad, _LANES)
        partial = call(p2, p0_2d, f_2d)          # (16, 128) raw partials
        return jnp.float32(scale) * jnp.sum(partial)

    return loss_fn


def loss_params_regular(params, params_init, params_fisher, *, gamma=50000.0,
                        tile_rows=8192, trainable=None):
    """One-shot convenience wrapper (use make_loss_params_regular for reuse)."""
    loss_fn = make_loss_params_regular(params_init, params_fisher, gamma=gamma,
                                       tile_rows=tile_rows, trainable=trainable)
    return loss_fn(params)


def _reference(params, params_init, params_fisher, *, gamma=50000.0, trainable=None):
    loss = jnp.float32(0.0)
    for n in sorted(params):
        if trainable is not None and not trainable.get(n, True):
            continue
        d = params[n].astype(jnp.float32) - params_init[n].astype(jnp.float32)
        loss += jnp.sum(0.5 * gamma * params_fisher[n].astype(jnp.float32) * d * d)
    return loss


if __name__ == "__main__":
    key = jax.random.PRNGKey(0)
    shapes = {
        "encoder.weight": (64, 64),
        "encoder.bias": (64,),
        "decoder.weight": (4, 8, 3, 3),
        "decoder.bias": (8,),
    }
    params, params_init, params_fisher = {}, {}, {}
    for i, (name, shp) in enumerate(sorted(shapes.items())):
        k1, k2, k3 = jax.random.split(jax.random.fold_in(key, i), 3)
        params[name] = jax.random.normal(k1, shp, dtype=jnp.float32)
        params_init[name] = jax.random.normal(k2, shp, dtype=jnp.float32)
        params_fisher[name] = jax.random.uniform(k3, shp, dtype=jnp.float32)

    ok = True

    # 1) default tiling (tiles clamped to data size; single block per core)
    loss = jax.block_until_ready(
        loss_params_regular(params, params_init, params_fisher, gamma=50000.0))
    ref = _reference(params, params_init, params_fisher, gamma=50000.0)
    ok &= bool(jnp.allclose(loss, ref, rtol=1e-5, atol=1e-2))

    # 2) tiny tiles -> multi-step reduction axis (exercises init/accumulate)
    loss2 = jax.block_until_ready(
        loss_params_regular(params, params_init, params_fisher,
                            gamma=50000.0, tile_rows=16))
    ok &= bool(jnp.allclose(loss2, ref, rtol=1e-5, atol=1e-2))

    # 3) requires_grad filter analog
    trainable = {"decoder.bias": False}
    loss3 = jax.block_until_ready(
        loss_params_regular(params, params_init, params_fisher,
                            gamma=50000.0, trainable=trainable))
    ref3 = _reference(params, params_init, params_fisher,
                      gamma=50000.0, trainable=trainable)
    ok &= bool(jnp.allclose(loss3, ref3, rtol=1e-5, atol=1e-2))

    # 4) cached-constants path: reuse one loss_fn across two "training steps"
    loss_fn = make_loss_params_regular(params_init, params_fisher, gamma=50000.0)
    l_a = jax.block_until_ready(loss_fn(params))
    params_b = {n: v + 0.1 for n, v in params.items()}
    l_b = jax.block_until_ready(loss_fn(params_b))
    ok &= bool(jnp.allclose(l_a, ref, rtol=1e-5, atol=1e-2))
    ok &= bool(jnp.allclose(
        l_b, _reference(params_b, params_init, params_fisher, gamma=50000.0),
        rtol=1e-5, atol=1e-2))

    if not ok:
        raise SystemExit("mismatch vs reference")
    print("KERNEL_OK")
</pallas_src>

<mosaic_0001>
module attributes {stable_mosaic.version = 11 : i64} {
  func.func @_ewc_kernel(%arg0: i32, %arg1: i32, %arg2: memref<24x128xf32, #tpu.memory_space<vmem>>, %arg3: memref<24x128xf32, #tpu.memory_space<vmem>>, %arg4: memref<24x128xf32, #tpu.memory_space<vmem>>, %arg5: memref<8x128xf32, #tpu.memory_space<vmem>>) attributes {dimension_semantics = [#tpu.dimension_semantics<parallel>, #tpu.dimension_semantics<arbitrary>], iteration_bounds = array<i64: 2, 1>, scalar_prefetch = 0 : i64, scratch_operands = 0 : i64, tpu.core_type = #tpu.core_type<tc>, window_params = [{transform_indices = @transform_0, window_bounds = array<i64: 24, 128>}, {transform_indices = @transform_1, window_bounds = array<i64: 24, 128>}, {transform_indices = @transform_2, window_bounds = array<i64: 24, 128>}, {transform_indices = @transform_3, window_bounds = array<i64: 8, 128>}]} {
    %c0_i32 = arith.constant 0 : i32
    %0 = arith.cmpi eq, %arg1, %c0_i32 : i32
    %1 = arith.extui %0 : i1 to i32
    %c0_i32_0 = arith.constant 0 : i32
    %2 = arith.cmpi ne, %1, %c0_i32_0 : i32
    scf.if %2 {
      %cst_8 = arith.constant 0.000000e+00 : f32
      %19 = vector.broadcast %cst_8 : f32 to vector<8x128xf32>
      %c0_9 = arith.constant 0 : index
      %c0_10 = arith.constant 0 : index
      %20 = vector.load %arg5[%c0_9, %c0_10] : memref<8x128xf32, #tpu.memory_space<vmem>>, vector<8x128xf32>
      tpu.vector_store %arg5[%c0_9, %c0_10], %19 {strides = array<i32>} : memref<8x128xf32, #tpu.memory_space<vmem>>, vector<8x128xf32>,
    } else {
    }
    %c0_i32_1 = arith.constant 0 : i32
    %c24_i32 = arith.constant 24 : i32
    %3 = arith.muli %c0_i32_1, %c24_i32 : i32
    %4 = tpu.assume_multiple %3, 24 : i32
    %5 = arith.index_cast %4 : i32 to index
    %c0 = arith.constant 0 : index
    %6 = vector.load %arg2[%5, %c0] : memref<24x128xf32, #tpu.memory_space<vmem>>, vector<24x128xf32>
    %7 = arith.index_cast %4 : i32 to index
    %c0_2 = arith.constant 0 : index
    %8 = vector.load %arg3[%7, %c0_2] : memref<24x128xf32, #tpu.memory_space<vmem>>, vector<24x128xf32>
    %9 = arith.index_cast %4 : i32 to index
    %c0_3 = arith.constant 0 : index
    %10 = vector.load %arg4[%9, %c0_3] : memref<24x128xf32, #tpu.memory_space<vmem>>, vector<24x128xf32>
    %11 = arith.subf %6, %8 : vector<24x128xf32>
    %12 = arith.mulf %10, %11 : vector<24x128xf32>
    %13 = arith.mulf %12, %11 : vector<24x128xf32>
    %c0_4 = arith.constant 0 : index
    %c0_5 = arith.constant 0 : index
    %14 = vector.load %arg5[%c0_4, %c0_5] : memref<8x128xf32, #tpu.memory_space<vmem>>, vector<8x128xf32>
    %15 = vector.shape_cast %13 : vector<24x128xf32> to vector<3x8x128xf32>
    %cst = arith.constant dense<0.000000e+00> : vector<8x128xf32>
    %16 = vector.multi_reduction <add>, %15, %cst [0] : vector<3x8x128xf32> to vector<8x128xf32>
    %17 = arith.addf %14, %16 : vector<8x128xf32>
    %c0_6 = arith.constant 0 : index
    %c0_7 = arith.constant 0 : index
    %18 = vector.load %arg5[%c0_6, %c0_7] : memref<8x128xf32, #tpu.memory_space<vmem>>, vector<8x128xf32>
    tpu.vector_store %arg5[%c0_6, %c0_7], %17 {strides = array<i32>} : memref<8x128xf32, #tpu.memory_space<vmem>>, vector<8x128xf32>,
    %c1_i32 = arith.constant 1 : i32
    return
  }
  func.func @transform_0(%arg0: i32, %arg1: i32) -> (i32, i32) {
    %c1_i32 = arith.constant 1 : i32
    %0 = arith.muli %arg0, %c1_i32 : i32
    %1 = arith.addi %0, %arg1 : i32
    %c0_i32 = arith.constant 0 : i32
    %c0_i32_0 = arith.constant 0 : i32
    return %1, %c0_i32 : i32, i32
  }
  func.func @transform_1(%arg0: i32, %arg1: i32) -> (i32, i32) {
    %c1_i32 = arith.constant 1 : i32
    %0 = arith.muli %arg0, %c1_i32 : i32
    %1 = arith.addi %0, %arg1 : i32
    %c0_i32 = arith.constant 0 : i32
    %c0_i32_0 = arith.constant 0 : i32
    return %1, %c0_i32 : i32, i32
  }
  func.func @transform_2(%arg0: i32, %arg1: i32) -> (i32, i32) {
    %c1_i32 = arith.constant 1 : i32
    %0 = arith.muli %arg0, %c1_i32 : i32
    %1 = arith.addi %0, %arg1 : i32
    %c0_i32 = arith.constant 0 : i32
    %c0_i32_0 = arith.constant 0 : i32
    return %1, %c0_i32 : i32, i32
  }
  func.func @transform_3(%arg0: i32, %arg1: i32) -> (i32, i32) {
    %c0_i32 = arith.constant 0 : i32
    %c0_i32_0 = arith.constant 0 : i32
    return %arg0, %c0_i32 : i32, i32
  }
}

</mosaic_0001>

<llo_original>
// kernel: tpu_custom_call.1
$region0: #{tpu_custom_call.1}
  #allocation0 [shape = 'u32[]', space=smem, size = 0x4, offset = 0x4, fixed_abs, tag = 'smem constant byte address 0x4 - core index']
  #allocation1 [shape = 'u32[144,128]{1,0:T(1,128)}', space=vmem, size = 0x12000, scoped, tag = 'internal scratch']
  %s0 = inlined_call_operand.hbm [shape: f32[48,128], index: 0, kind: input, shape index: {}]
  %s1 = inlined_call_operand.hbm [shape: f32[48,128], index: 1, kind: input, shape index: {}]
  %s2 = inlined_call_operand.hbm [shape: f32[48,128], index: 2, kind: input, shape index: {}]
  %s3 = inlined_call_operand.hbm [shape: f32[16,128], index: 3, kind: output, shape index: {}]
  %s4 = sld [smem:[#allocation0]]
  $region61: #{tpu_custom_call.1} parent=0
    _
  %s6 = ssub.s32 1, %s4
  %s7 = scalar_select 0, %s6, %s4
  $region1: #{tpu_custom_call.1} parent=0
    #allocation2 [shape = 'u8[24576]{0}', space=vmem, size = 0x6000, scoped, tag = 'input window, operand 0']
    #allocation3 [shape = 's32[2]{0}', space=sflag, size = 0x8, scoped, tag = 'scoped memory for tpu_custom_call.1']
    #allocation4 [shape = 's32[2]{0}', space=sflag, size = 0x8, scoped, tag = 'scoped memory for tpu_custom_call.1']
    #allocation5 [shape = 'u8[24576]{0}', space=vmem, size = 0x6000, scoped, tag = 'input window, operand 1']
    #allocation6 [shape = 's32[2]{0}', space=sflag, size = 0x8, scoped, tag = 'scoped memory for tpu_custom_call.1']
    #allocation7 [shape = 'u8[24576]{0}', space=vmem, size = 0x6000, scoped, tag = 'input window, operand 2']
    #allocation8 [shape = 'u8[8192]{0}', space=vmem, size = 0x2000, scoped, tag = 'output window, operand 0']
    %8 = vsyncpa [#allocation3], 0
    %s9 = scalar_lea.sflag [#allocation3], 1
    %10 = vsyncpa %s9, 0
    %11 = vsyncpa [#allocation6], 0
    %s12 = scalar_lea.sflag [#allocation6], 1
    %13 = vsyncpa %s12, 0
    %14 = vsyncpa [#allocation4], 0
    %s15 = scalar_lea.sflag [#allocation4], 1
    %16 = vsyncpa %s15, 0
    loop: start=0, step=1, limit=4
    $region2: #{tpu_custom_call.1} parent=1 // loop_pre_header
      _
    $region3: #{tpu_custom_call.1} parent=1 // loop_header
      %s18 = sphi 0, %s22
      %p19 = scmp.ge.s32.totalorder %s18, 4
      %s25 = sphi 0, %s37
      %s26 = sphi 0, %s33
      %s27 = sphi 0, %s25
      %s28 = sphi 0, %s26
      %s29 = sphi 0, %s27
      %s30 = sphi 0, %s28
      %s42 = sphi 0, %s44
      %s45 = sphi 0, %s42
      %s46 = sphi 0, %s45
      %s62 = sphi 0, %s46
      %s70 = sphi 0, %s72
      %s73 = sphi 0, %s70
      %s74 = sphi 0, %s73
      %s90 = sphi 0, %s74
      %s98 = sphi 0, %s100
      %s101 = sphi 0, %s98
      %s102 = sphi 0, %s101
      %s118 = sphi 0, %s102
      %s124 = sphi 0, %s126
      %s127 = sphi 0, %s124
      %s128 = sphi 0, %s127
      %s144 = sphi 0, %s128
    $region4: #{tpu_custom_call.1} parent=1 // loop_header_branch
      %21 = sbr.rel (%p19) target = $region8
    $region5: #{tpu_custom_call.1} parent=1 // loop_body
      %s23 = ssub.s32 %s18, 1
      %s24 = ssub.s32 %s18, 2
      %s31 = sadd.s32 1, %s26
      %p32 = scmp.ge.s32.totalorder %s31, 1
      %s33 = scalar_select %p32, 0, %s31
      %s34 = sadd.s32 1, %s25
      %s35 = scalar_select %p32, %s34, %s25
      %p36 = scmp.ge.s32.totalorder %s35, 2
      %s37 = scalar_select %p36, 0, %s35
      %s38 = sadd.s32 %s25, %s26
      %s39 = sadd.s32 %s37, %s33
      %s40 = ssub.s32 %s38, %s39
      %p41 = scmp.eq.s32.totalorder %s40, 0
      %s43 = sadd.s32 %s42, 1
      %s44 = scalar_select %p41, %s42, %s43
      %p47 = pneg %p41
      %p48 = scmp.eq.s32.totalorder %s18, 1
      %p49 = por %p47, %p48
      %p50 = scmp.ne.s32.totalorder %s42, %s45
      %p51 = scmp.eq.s32.totalorder %s18, 0
      %p52 = por %p50, %p51
      %p53 = scmp.ne.s32.totalorder %s42, %s45
      %p54 = scmp.eq.s32.totalorder %s23, 1
      %p55 = por %p53, %p54
      %p56 = scmp.ne.s32.totalorder %s45, %s46
      %p57 = scmp.eq.s32.totalorder %s23, 0
      %p58 = por %p56, %p57
      %p59 = scmp.ne.s32.totalorder %s45, %s46
      %p60 = scmp.eq.s32.totalorder %s24, 1
      %p61 = por %p59, %p60
      %p63 = scmp.ne.s32.totalorder %s46, %s62
      %p64 = scmp.eq.s32.totalorder %s24, 0
      %p65 = por %p63, %p64
      %s66 = sadd.s32 %s25, %s26
      %s67 = sadd.s32 %s37, %s33
      %s68 = ssub.s32 %s66, %s67
      %p69 = scmp.eq.s32.totalorder %s68, 0
      %s71 = sadd.s32 %s70, 1
      %s72 = scalar_select %p69, %s70, %s71
      %p75 = pneg %p69
      %p76 = scmp.eq.s32.totalorder %s18, 1
      %p77 = por %p75, %p76
      %p78 = scmp.ne.s32.totalorder %s70, %s73
      %p79 = scmp.eq.s32.totalorder %s18, 0
      %p80 = por %p78, %p79
      %p81 = scmp.ne.s32.totalorder %s70, %s73
      %p82 = scmp.eq.s32.totalorder %s23, 1
      %p83 = por %p81, %p82
      %p84 = scmp.ne.s32.totalorder %s73, %s74
      %p85 = scmp.eq.s32.totalorder %s23, 0
      %p86 = por %p84, %p85
      %p87 = scmp.ne.s32.totalorder %s73, %s74
      %p88 = scmp.eq.s32.totalorder %s24, 1
      %p89 = por %p87, %p88
      %p91 = scmp.ne.s32.totalorder %s74, %s90
      %p92 = scmp.eq.s32.totalorder %s24, 0
      %p93 = por %p91, %p92
      %s94 = sadd.s32 %s25, %s26
      %s95 = sadd.s32 %s37, %s33
      %s96 = ssub.s32 %s94, %s95
      %p97 = scmp.eq.s32.totalorder %s96, 0
      %s99 = sadd.s32 %s98, 1
      %s100 = scalar_select %p97, %s98, %s99
      %p103 = pneg %p97
      %p104 = scmp.eq.s32.totalorder %s18, 1
      %p105 = por %p103, %p104
      %p106 = scmp.ne.s32.totalorder %s98, %s101
      %p107 = scmp.eq.s32.totalorder %s18, 0
      %p108 = por %p106, %p107
      %p109 = scmp.ne.s32.totalorder %s98, %s101
      %p110 = scmp.eq.s32.totalorder %s23, 1
      %p111 = por %p109, %p110
      %p112 = scmp.ne.s32.totalorder %s101, %s102
      %p113 = scmp.eq.s32.totalorder %s23, 0
      %p114 = por %p112, %p113
      %p115 = scmp.ne.s32.totalorder %s101, %s102
      %p116 = scmp.eq.s32.totalorder %s24, 1
      %p117 = por %p115, %p116
      %p119 = scmp.ne.s32.totalorder %s102, %s118
      %p120 = scmp.eq.s32.totalorder %s24, 0
      %p121 = por %p119, %p120
      %s122 = ssub.s32 %s25, %s37
      %p123 = scmp.eq.s32.totalorder %s122, 0
      %s125 = sadd.s32 %s124, 1
      %s126 = scalar_select %p123, %s124, %s125
      %p129 = pneg %p123
      %p130 = scmp.eq.s32.totalorder %s18, 1
      %p131 = por %p129, %p130
      %p132 = scmp.ne.s32.totalorder %s124, %s127
      %p133 = scmp.eq.s32.totalorder %s18, 0
      %p134 = por %p132, %p133
      %p135 = scmp.ne.s32.totalorder %s124, %s127
      %p136 = scmp.eq.s32.totalorder %s23, 1
      %p137 = por %p135, %p136
      %p138 = scmp.ne.s32.totalorder %s127, %s128
      %p139 = scmp.eq.s32.totalorder %s23, 0
      %p140 = por %p138, %p139
      %p141 = scmp.ne.s32.totalorder %s127, %s128
      %p142 = scmp.eq.s32.totalorder %s24, 1
      %p143 = por %p141, %p142
      %p145 = scmp.ne.s32.totalorder %s128, %s144
      %p146 = scmp.eq.s32.totalorder %s24, 0
      %p147 = por %p145, %p146
      %p148 = scmp.le.s32.totalorder 1, %s18
      %p149 = scmp.lt.s32.totalorder %s18, 3
      %p150 = pnand %p148, %p149
      %p151 = pneg %p150
      // Predicated region
      $region9: #{tpu_custom_call.1} parent=5 // pred_check
        _
      $region10: #{tpu_custom_call.1} parent=5 // pred_check_branch
        %153 = sbr.rel (%p150) target = $region12
      $region11: #{tpu_custom_call.1} parent=5 // pred_region
        %s154 = ssub.s32 %s18, 1
      $region12: #{tpu_custom_call.1} parent=5 // pred_fallthru
        _
      %p155 = scmp.lt.s32.totalorder %s18, 2
      // Predicated region
      $region13: #{tpu_custom_call.1} parent=5 // pred_check
        %p156 = pneg %p155
      $region14: #{tpu_custom_call.1} parent=5 // pred_check_branch
        %158 = sbr.rel (%p156) target = $region16
      $region15: #{tpu_custom_call.1} parent=5 // pred_region
        // Predicated region
        $region17: #{tpu_custom_call.1} parent=15 // pred_check
          %p159 = pneg %p52
        $region18: #{tpu_custom_call.1} parent=15 // pred_check_branch
          %161 = sbr.rel (%p159) target = $region20
        $region19: #{tpu_custom_call.1} parent=15 // pred_region
          %s162 = sand.u32 %s42, 1
          %s163 = scalar_lea.sflag [#allocation3], %s162
          %s164 = sand.u32 %s42, 1
          %s165 = smul.addr %s164, 24
          %s166 = scalar_lea.vmem [#allocation2], %s165
          %s167 = sadd.s32 %s25, %s26
          %s168 = smul.u32 3, %s167
          %s170 = ssub.s32 384, 384
          %171 = vsyncadd %s163, %s170
          %s172 = smul.addr %s168, 128
          %s173 = scalar_lea.hbm %s0, %s172
          %s174 = sshll.u32 %s166, 4
          %s175 = int_to_ptr.vmem [resolvable:$true] %s174
          %180 = dma.hbm_to_vmem [thread:$0]  %s173, 384, %s175, %s163, 128, 128, 8
        $region20: #{tpu_custom_call.1} parent=15 // pred_fallthru
          _
        // Predicated region
        $region21: #{tpu_custom_call.1} parent=15 // pred_check
          %p181 = pneg %p80
        $region22: #{tpu_custom_call.1} parent=15 // pred_check_branch
          %183 = sbr.rel (%p181) target = $region24
        $region23: #{tpu_custom_call.1} parent=15 // pred_region
          %s184 = sand.u32 %s18, 1
          %s185 = scalar_lea.sflag [#allocation6], %s184
          %s186 = sand.u32 %s70, 1
          %s187 = smul.addr %s186, 24
          %s188 = scalar_lea.vmem [#allocation5], %s187
          %s189 = sadd.s32 %s25, %s26
          %s190 = smul.u32 3, %s189
          %s192 = ssub.s32 384, 384
          %193 = vsyncadd %s185, %s192
          %s194 = smul.addr %s190, 128
          %s195 = scalar_lea.hbm %s1, %s194
          %s196 = sshll.u32 %s188, 4
          %s197 = int_to_ptr.vmem [resolvable:$true] %s196
          %202 = dma.hbm_to_vmem [thread:$0]  %s195, 384, %s197, %s185, 128, 128, 8
        $region24: #{tpu_custom_call.1} parent=15 // pred_fallthru
          _
        // Predicated region
        $region25: #{tpu_custom_call.1} parent=15 // pred_check
          %p203 = pneg %p108
        $region26: #{tpu_custom_call.1} parent=15 // pred_check_branch
          %205 = sbr.rel (%p203) target = $region28
        $region27: #{tpu_custom_call.1} parent=15 // pred_region
          %s206 = sand.u32 %s18, 1
          %s207 = scalar_lea.sflag [#allocation6], %s206
          %s208 = sand.u32 %s98, 1
          %s209 = smul.addr %s208, 24
          %s210 = scalar_lea.vmem [#allocation7], %s209
          %s211 = sadd.s32 %s25, %s26
          %s212 = smul.u32 3, %s211
          %s214 = ssub.s32 384, 384
          %215 = vsyncadd %s207, %s214
          %s216 = smul.addr %s212, 128
          %s217 = scalar_lea.hbm %s2, %s216
          %s218 = sshll.u32 %s210, 4
          %s219 = int_to_ptr.vmem [resolvable:$true] %s218
          %224 = dma.hbm_to_vmem [thread:$0]  %s217, 384, %s219, %s207, 128, 128, 8
        $region28: #{tpu_custom_call.1} parent=15 // pred_fallthru
          _
      $region16: #{tpu_custom_call.1} parent=5 // pred_fallthru
        _
      %p225 = scmp.le.s32.totalorder 1, %s18
      %p226 = scmp.lt.s32.totalorder %s18, 3
      %p227 = pnand %p225, %p226
      %p228 = pneg %p227
      // Predicated region
      $region29: #{tpu_custom_call.1} parent=5 // pred_check
        _
      $region30: #{tpu_custom_call.1} parent=5 // pred_check_branch
        %230 = sbr.rel (%p227) target = $region32
      $region31: #{tpu_custom_call.1} parent=5 // pred_region
        %s231 = ssub.s32 %s18, 1
        %s232 = sand.u32 %s45, 1
        %s233 = scalar_lea.sflag [#allocation3], %s232
        %s234 = sand.u32 %s45, 1
        %s235 = smul.addr %s234, 24
        %s236 = scalar_lea.vmem [#allocation2], %s235
        // Predicated region
        $region33: #{tpu_custom_call.1} parent=31 // pred_check
          %p237 = pneg %p58
        $region34: #{tpu_custom_call.1} parent=31 // pred_check_branch
          %239 = sbr.rel (%p237) target = $region36
        $region35: #{tpu_custom_call.1} parent=31 // pred_region
          %240 = dma.done %s233, 384
        $region36: #{tpu_custom_call.1} parent=31 // pred_fallthru
          _
        %s241 = sand.u32 %s23, 1
        %s242 = scalar_lea.sflag [#allocation6], %s241
        %s243 = sand.u32 %s73, 1
        %s244 = smul.addr %s243, 24
        %s245 = scalar_lea.vmem [#allocation5], %s244
        // Predicated region
        $region37: #{tpu_custom_call.1} parent=31 // pred_check
          %p246 = pneg %p86
        $region38: #{tpu_custom_call.1} parent=31 // pred_check_branch
          %248 = sbr.rel (%p246) target = $region40
        $region39: #{tpu_custom_call.1} parent=31 // pred_region
          %249 = dma.done %s242, 384
        $region40: #{tpu_custom_call.1} parent=31 // pred_fallthru
          _
        %s250 = sand.u32 %s23, 1
        %s251 = scalar_lea.sflag [#allocation6], %s250
        %s252 = sand.u32 %s101, 1
        %s253 = smul.addr %s252, 24
        %s254 = scalar_lea.vmem [#allocation7], %s253
        // Predicated region
        $region41: #{tpu_custom_call.1} parent=31 // pred_check
          %p255 = pneg %p114
        $region42: #{tpu_custom_call.1} parent=31 // pred_check_branch
          %257 = sbr.rel (%p255) target = $region44
        $region43: #{tpu_custom_call.1} parent=31 // pred_region
          %258 = dma.done %s251, 384
        $region44: #{tpu_custom_call.1} parent=31 // pred_fallthru
          _
        %s259 = sand.u32 %s45, 1
        %s260 = scalar_lea.sflag [#allocation3], %s259
        %s261 = sand.u32 %s45, 1
        %s262 = smul.addr %s261, 24
        %s263 = scalar_lea.vmem [#allocation2], %s262
        %p264 = pneg %p58
        %p265 = pneg %p55
        %s266 = sand.u32 %s23, 1
        %s267 = scalar_lea.sflag [#allocation6], %s266
        %s268 = sand.u32 %s73, 1
        %s269 = smul.addr %s268, 24
        %s270 = scalar_lea.vmem [#allocation5], %s269
        %p271 = pneg %p86
        %p272 = pneg %p83
        %s273 = sand.u32 %s23, 1
        %s274 = scalar_lea.sflag [#allocation6], %s273
        %s275 = sand.u32 %s101, 1
        %s276 = smul.addr %s275, 24
        %s277 = scalar_lea.vmem [#allocation7], %s276
        %p278 = pneg %p114
        %p279 = pneg %p111
        %p280 = pneg %p140
        %p281 = pneg %p137
        %s282 = sand.u32 %s127, 1
        %s283 = scalar_lea.sflag [#allocation4], %s282
        %s284 = sand.u32 %s127, 1
        %s285 = smul.addr %s284, 8
        %s286 = scalar_lea.vmem [#allocation8], %s285
        %s287 = sadd.s32 %s27, %s28
        %s288 = smul.u32 3, %s287
        %s289 = sadd.s32 %s27, %s28
        %s290 = smul.u32 3, %s289
        %s291 = sadd.s32 %s27, %s28
        %s292 = smul.u32 3, %s291
        %p293 = scmp.eq.s32.totalorder %s28, 0
        // Predicated region
        $region45: #{tpu_custom_call.1} parent=31 // pred_check
          %p294 = pneg %p293
        $region46: #{tpu_custom_call.1} parent=31 // pred_check_branch
          %296 = sbr.rel (%p294) target = $region48
        $region47: #{tpu_custom_call.1} parent=31 // pred_region
          %297 = vst [vmem:[%s286] sm:$0xff] 0.0
        $region48: #{tpu_custom_call.1} parent=31 // pred_fallthru
          _
        %v298 = vld [vmem:[%s236] sm:$0xff]
        %v299 = vld [vmem:[%s236 + $0x8] sm:$0xff]
        %v300 = vld [vmem:[%s236 + $0x10] sm:$0xff]
        %v301 = vld [vmem:[%s245] sm:$0xff]
        %v302 = vld [vmem:[%s245 + $0x8] sm:$0xff]
        %v303 = vld [vmem:[%s245 + $0x10] sm:$0xff]
        %v304 = vld [vmem:[%s254] sm:$0xff]
        %v305 = vld [vmem:[%s254 + $0x8] sm:$0xff]
        %v306 = vld [vmem:[%s254 + $0x10] sm:$0xff]
        %v307 = vsub.f32 %v298, %v301
        %v308 = vsub.f32 %v299, %v302
        %v309 = vsub.f32 %v300, %v303
        %v310 = vmul.f32 %v304, %v307
        %v311 = vmul.f32 %v305, %v308
        %v312 = vmul.f32 %v306, %v309
        %v313 = vmul.f32 %v310, %v307
        %v314 = vmul.f32 %v311, %v308
        %v315 = vmul.f32 %v312, %v309
        %v316 = vld [vmem:[%s286] sm:$0xff]
        %v317 = vadd.f32 %v313, %v314
        %v318 = vadd.f32 %v317, %v315
        %v319 = vadd.f32 %v316, %v318
        %320 = vst [vmem:[%s286] sm:$0xff] %v319
        %s321 = sand.u32 %s127, 1
        %s322 = scalar_lea.sflag [#allocation4], %s321
        %s323 = sand.u32 %s127, 1
        %s324 = smul.addr %s323, 8
        %s325 = scalar_lea.vmem [#allocation8], %s324
        // Predicated region
        $region49: #{tpu_custom_call.1} parent=31 // pred_check
          %p326 = pneg %p137
        $region50: #{tpu_custom_call.1} parent=31 // pred_check_branch
          %328 = sbr.rel (%p326) target = $region52
        $region51: #{tpu_custom_call.1} parent=31 // pred_region
          %s330 = ssub.s32 128, 128
          %331 = vsyncadd %s322, %s330
          %s332 = smul.addr %s27, 128
          %s333 = scalar_lea.hbm %s3, %s332
          %s335 = sshll.u32 %s325, 4
          %s336 = int_to_ptr.vmem [resolvable:$true] %s335
          %338 = dma.vmem_to_hbm [thread:$0]  %s336, 128, %s333, %s322
        $region52: #{tpu_custom_call.1} parent=31 // pred_fallthru
          _
      $region32: #{tpu_custom_call.1} parent=5 // pred_fallthru
        _
      %p339 = scmp.le.s32.totalorder 2, %s18
      // Predicated region
      $region53: #{tpu_custom_call.1} parent=5 // pred_check
        %p340 = pneg %p339
      $region54: #{tpu_custom_call.1} parent=5 // pred_check_branch
        %342 = sbr.rel (%p340) target = $region56
      $region55: #{tpu_custom_call.1} parent=5 // pred_region
        %s343 = ssub.s32 %s18, 2
        // Predicated region
        $region57: #{tpu_custom_call.1} parent=55 // pred_check
          %p344 = pneg %p143
        $region58: #{tpu_custom_call.1} parent=55 // pred_check_branch
          %346 = sbr.rel (%p344) target = $region60
        $region59: #{tpu_custom_call.1} parent=55 // pred_region
          %s347 = sand.u32 %s128, 1
          %s348 = scalar_lea.sflag [#allocation4], %s347
          %s349 = sand.u32 %s128, 1
          %s350 = smul.addr %s349, 8
          %s351 = scalar_lea.vmem [#allocation8], %s350
          %352 = dma.done %s348, 128
        $region60: #{tpu_custom_call.1} parent=55 // pred_fallthru
          _
      $region56: #{tpu_custom_call.1} parent=5 // pred_fallthru
        _
    $region6: #{tpu_custom_call.1} parent=1 // loop_footer
      %s22 = sadd.s32 1, %s18
    $region7: #{tpu_custom_call.1} parent=1 // loop_footer_branch
      %17 = sbr.rel target = $region3
    $region8: #{tpu_custom_call.1} parent=1 // loop_exit
      _
    %353 = vsyncpa [#allocation3], 1
    %s354 = scalar_lea.sflag [#allocation3], 1
    %355 = vsyncpa %s354, 1
    %356 = vsyncpa [#allocation6], 1
    %s357 = scalar_lea.sflag [#allocation6], 1
    %358 = vsyncpa %s357, 1
    %359 = vsyncpa [#allocation4], 1
    %s360 = scalar_lea.sflag [#allocation4], 1
    %361 = vsyncpa %s360, 1

</llo_original>
